<compile_context>
chip_gen: v5e
topology: v5e:2x2
jax: 0.10.0
libtpu: 0.0.40
codegen_flags: <defaults>
</compile_context>

<pallas_src>
import jax
import jax.numpy as jnp
from jax.experimental import pallas as pl


def _identity_alias_kernel(x_ref, o_ref):
    # Output is aliased to the input buffer: nothing to read, move, or write.
    # (Intentionally empty — see module docstring; `pltpu.touch` is not
    # interpreter-safe and is unnecessary here.)
    del x_ref, o_ref


_ZERO_COST = pl.CostEstimate(flops=0, transcendentals=0, bytes_accessed=0)


def cnn1d_temporal_forward(x: jax.Array) -> jax.Array:
    """Pallas implementation of cnn1d_temporal.forward (identity).

    NOTE: for the alias below to be free, the caller should donate the input
    buffer (see `cnn1d_temporal_forward_donated`).  Without donation, XLA
    makes a single full-bandwidth device copy to satisfy the alias — still
    strictly cheaper than any tiled VMEM round trip.
    """
    return pl.pallas_call(
        _identity_alias_kernel,
        out_shape=jax.ShapeDtypeStruct(x.shape, x.dtype),
        # Leave the tensor where it lives: raw refs, no auto tiling / DMA.
        in_specs=[pl.BlockSpec(memory_space=pl.ANY)],
        out_specs=pl.BlockSpec(memory_space=pl.ANY),
        # Single output aliases the single input: zero HBM traffic inside the
        # kernel, O(1) runtime regardless of (N, C, L) when the buffer is donated.
        input_output_aliases={0: 0},
        # Declare the call zero-cost so XLA doesn't schedule conservatively
        # around the custom-call boundary.
        cost_estimate=_ZERO_COST,
    )(x)


# Recommended fast path: donating the argument lets XLA satisfy the alias in
# place (no defensive copy at all).
cnn1d_temporal_forward_donated = jax.jit(cnn1d_temporal_forward, donate_argnums=0)


if __name__ == "__main__":
    key = jax.random.PRNGKey(0)
    # (batch=2, channels=4, length=16) — small NCW input consistent with a 1D CNN module.
    x = jax.random.normal(key, (2, 4, 16), dtype=jnp.float32)
    x_host = jax.device_get(x)  # host reference copy (survives donation below)

    # Non-donated path: correct for callers that cannot donate.
    y = cnn1d_temporal_forward(x)
    jax.block_until_ready(y)
    assert y.shape == x.shape and y.dtype == x.dtype
    assert bool(jnp.all(y == jnp.asarray(x_host)))

    # Donated path: the input buffer is reused in place (true O(1)).
    y2 = cnn1d_temporal_forward_donated(x)  # x's buffer may be consumed here
    jax.block_until_ready(y2)
    assert y2.shape == x_host.shape and y2.dtype == jnp.float32
    assert bool(jnp.all(y2 == jnp.asarray(x_host)))

    print("KERNEL_OK")
</pallas_src>

<mosaic_0001>
module attributes {stable_mosaic.version = 11 : i64} {
  func.func @_identity_alias_kernel(%arg0: memref<2x4x16xf32, #tpu.memory_space<any>>, %arg1: memref<2x4x16xf32, #tpu.memory_space<any>>) attributes {dimension_semantics = [], scalar_prefetch = 0 : i64, scratch_operands = 0 : i64, tpu.core_type = #tpu.core_type<tc>} {
    return
  }
}

</mosaic_0001>

<llo_original>
// kernel: tpu_custom_call.1
$region0: #{tpu_custom_call.1}
  #allocation0 [shape = 'u32[]', space=smem, size = 0x4, offset = 0x4, fixed_abs, tag = 'smem constant byte address 0x4 - core index']
  #allocation1 [shape = 'u32[72,128]{1,0:T(1,128)}', space=vmem, size = 0x9000, scoped, tag = 'internal scratch']
  %s0 = inlined_call_operand.hbm [shape: f32[2,4,16], index: 0, kind: input, shape index: {}, may-alias: {0,1}]
  %s1 = inlined_call_operand.hbm [shape: f32[2,4,16], index: 1, kind: output, shape index: {}, may-alias: {0,1}]
  %s2 = sld [smem:[#allocation0]]
  $region2: #{tpu_custom_call.1} parent=0
    _
  %s4 = ssub.s32 1, %s2
  %s5 = scalar_select 0, %s4, %s2

</llo_original>
